<compile_context>
chip_gen: v7x
topology: tpu7x:2x2x1
jax: 0.10.0
libtpu: 0.0.40
codegen_flags: <defaults>
</compile_context>

<pallas_src>
import functools

import jax
import jax.numpy as jnp
from jax.experimental import pallas as pl
from jax.experimental.pallas import tpu as pltpu


def _linear1x1_kernel(x_ref, w_ref, b_ref, o_ref):
    """o = x * w + b on one lane-dense (BR, L) slab tile (pure VPU FMA)."""
    # Hoist the SMEM scalar reads/broadcasts once (JAX does not CSE them).
    w = w_ref[0, 0]
    b = b_ref[0, 0]
    # Cast in-kernel: free VPU work hidden under the tile DMA (no-op for f32).
    x = x_ref[...].astype(jnp.float32)
    o_ref[...] = (x * w + b).astype(o_ref.dtype)


def _round_up(x, m):
    return ((x + m - 1) // m) * m


@functools.partial(jax.jit, static_argnames=("target_block_bytes",))
def linear_forward(x, w, b, *, target_block_bytes=2 * 1024 * 1024):
    """Forward pass of nn.Linear(1, 1): out = x @ w.T + b, shape (batch, 1)."""
    batch, in_features = x.shape
    out_features, w_in = w.shape
    # Specialized to the module spec: input_dim = output_dim = 1.
    assert in_features == 1 and out_features == 1 and w_in == 1

    w_s = w.reshape(1, 1).astype(jnp.float32)   # scalar weight -> SMEM
    b_s = b.reshape(1, 1).astype(jnp.float32)   # scalar bias   -> SMEM

    # ---- lane-dense slab view (zero data movement when batch % 128 == 0) ----
    flat = x.reshape(batch)                      # free reshape of contiguous x
    if batch % 128 == 0:
        lane = 512 if batch % 512 == 0 else (256 if batch % 256 == 0 else 128)
        padded = batch
    elif batch < 128:
        # Tiny batch: a single short row.  Block == full array so the (8,128)
        # tiling rules don't apply; performance is irrelevant at this size.
        lane = batch
        padded = batch
    else:
        # Ragged batch: pad only the tail up to one 128-lane group.  This is
        # the only path that pays an extra HBM pass (pad + final slice).
        lane = 128
        padded = _round_up(batch, 128)

    if padded != batch:
        flat = jnp.pad(flat, (0, padded - batch))
    rows = padded // lane
    slab = flat.reshape(rows, lane)

    # ---- row-block sizing: ~target_block_bytes of f32 per grid step ----
    # 2 MiB blocks -> double-buffered in+out ~= 8 MiB, safe on v5e (16 MiB
    # default scoped VMEM), v6e (32/128 MiB) and v7x (32/64 MiB); large
    # batches naturally get a multi-step "parallel" grid for v7x's two TCs.
    br = max(8, target_block_bytes // (4 * lane))
    if rows <= br:
        br = rows                 # single block == full rows (always legal)
    else:
        br = (br // 8) * 8        # multiple of 8 sublanes
    grid = (pl.cdiv(rows, br),)

    out2d = pl.pallas_call(
        _linear1x1_kernel,
        out_shape=jax.ShapeDtypeStruct((rows, lane), jnp.float32),
        grid=grid,
        in_specs=[
            pl.BlockSpec((br, lane), lambda i: (i, 0)),  # lane-dense x tile (VMEM)
            pl.BlockSpec(memory_space=pltpu.SMEM),       # w scalar
            pl.BlockSpec(memory_space=pltpu.SMEM),       # b scalar
        ],
        out_specs=pl.BlockSpec((br, lane), lambda i: (i, 0)),
        compiler_params=pltpu.CompilerParams(
            dimension_semantics=("parallel",),  # shard row blocks across TCs (v7x)
        ),
    )(slab, w_s, b_s)

    out = out2d.reshape(padded)
    if padded != batch:
        out = out[:batch]
    return out.reshape(batch, out_features)


if __name__ == "__main__":
    input_dim = 1
    output_dim = 1
    batch = 8

    key = jax.random.PRNGKey(0)
    kx, kw, kb = jax.random.split(key, 3)

    # Deterministic parameters (shapes from nn.Linear(input_dim, output_dim)).
    w = jax.random.normal(kw, (output_dim, input_dim), jnp.float32)  # (1, 1)
    b = jax.random.normal(kb, (output_dim,), jnp.float32)            # (1,)
    x = jax.random.normal(kx, (batch, input_dim), jnp.float32)       # (8, 1)

    out = linear_forward(x, w, b)
    jax.block_until_ready(out)

    ref = x @ w.T + b
    assert out.shape == (batch, output_dim)
    assert jnp.allclose(out, ref, atol=1e-5, rtol=1e-5)

    # Extra check: exercises the lane-dense, pad-free path (batch % 512 == 0).
    x2 = jax.random.normal(kx, (1024, input_dim), jnp.float32)
    out2 = linear_forward(x2, w, b)
    jax.block_until_ready(out2)
    assert out2.shape == (1024, output_dim)
    assert jnp.allclose(out2, x2 @ w.T + b, atol=1e-5, rtol=1e-5)

    print("KERNEL_OK")
</pallas_src>

<mosaic_0001>
module attributes {stable_mosaic.version = 11 : i64} {
  func.func @_linear1x1_kernel(%arg0: i32, %arg1: memref<1x8xf32, #tpu.memory_space<vmem>>, %arg2: memref<1x1xf32, #tpu.memory_space<smem>>, %arg3: memref<1x1xf32, #tpu.memory_space<smem>>, %arg4: memref<1x8xf32, #tpu.memory_space<vmem>>) attributes {dimension_semantics = [#tpu.dimension_semantics<parallel>], iteration_bounds = array<i64: 1>, scalar_prefetch = 0 : i64, scratch_operands = 0 : i64, tpu.core_type = #tpu.core_type<tc>, window_params = [{transform_indices = @transform_0, window_bounds = array<i64: 1, 8>}, {transform_indices = @transform_1, window_bounds = array<i64: 1, 1>}, {transform_indices = @transform_2, window_bounds = array<i64: 1, 1>}, {transform_indices = @transform_3, window_bounds = array<i64: 1, 8>}]} {
    %c0 = arith.constant 0 : index
    %c0_0 = arith.constant 0 : index
    %0 = memref.load %arg2[%c0, %c0_0] : memref<1x1xf32, #tpu.memory_space<smem>>
    %c0_1 = arith.constant 0 : index
    %c0_2 = arith.constant 0 : index
    %1 = memref.load %arg3[%c0_1, %c0_2] : memref<1x1xf32, #tpu.memory_space<smem>>
    %c0_3 = arith.constant 0 : index
    %c0_4 = arith.constant 0 : index
    %2 = vector.load %arg1[%c0_3, %c0_4] : memref<1x8xf32, #tpu.memory_space<vmem>>, vector<1x8xf32>
    %3 = vector.broadcast %0 : f32 to vector<1x8xf32>
    %4 = arith.mulf %2, %3 : vector<1x8xf32>
    %5 = vector.broadcast %1 : f32 to vector<1x8xf32>
    %6 = arith.addf %4, %5 : vector<1x8xf32>
    %c0_5 = arith.constant 0 : index
    %c0_6 = arith.constant 0 : index
    %7 = vector.load %arg4[%c0_5, %c0_6] : memref<1x8xf32, #tpu.memory_space<vmem>>, vector<1x8xf32>
    tpu.vector_store %arg4[%c0_5, %c0_6], %6 {strides = array<i32>} : memref<1x8xf32, #tpu.memory_space<vmem>>, vector<1x8xf32>,
    return
  }
  func.func @transform_0(%arg0: i32) -> (i32, i32) {
    %c0_i32 = arith.constant 0 : i32
    %c0_i32_0 = arith.constant 0 : i32
    return %arg0, %c0_i32 : i32, i32
  }
  func.func @transform_1(%arg0: i32) -> (i32, i32) {
    %c0_i32 = arith.constant 0 : i32
    %c0_i32_0 = arith.constant 0 : i32
    %c0_i32_1 = arith.constant 0 : i32
    return %c0_i32, %c0_i32_0 : i32, i32
  }
  func.func @transform_2(%arg0: i32) -> (i32, i32) {
    %c0_i32 = arith.constant 0 : i32
    %c0_i32_0 = arith.constant 0 : i32
    %c0_i32_1 = arith.constant 0 : i32
    return %c0_i32, %c0_i32_0 : i32, i32
  }
  func.func @transform_3(%arg0: i32) -> (i32, i32) {
    %c0_i32 = arith.constant 0 : i32
    %c0_i32_0 = arith.constant 0 : i32
    return %arg0, %c0_i32 : i32, i32
  }
}

</mosaic_0001>

<llo_original>
// kernel: linear_forward.1
$region0: #{linear_forward.1}
  #allocation0 [shape = 'u32[]', space=smem, size = 0x4, offset = 0x4, fixed_abs, tag = 'smem constant byte address 0x4 - core index']
  #allocation1 [shape = 'u32[144,128]{1,0:T(1,128)}', space=vmem, size = 0x12000, scoped, tag = 'internal scratch']
  #allocation2 [shape = 'f32[1,1]{1,0:T(1,128)S(6)}', space=smem, size = 0x200, scoped, tag = 'scoped memory for linear_forward.1']
  #allocation3 [shape = 'f32[1,1]{1,0:T(1,128)S(6)}', space=smem, size = 0x200, scoped, tag = 'scoped memory for linear_forward.1']
  %s0 = inlined_call_operand.vmem [shape: f32[1,8], index: 0, kind: input, shape index: {}]
  %s1 = inlined_call_operand.<no memory space> [shape: f32[1,1], index: 1, kind: input, shape index: {}]
  %s2 = inlined_call_operand.<no memory space> [shape: f32[1,1], index: 2, kind: input, shape index: {}]
  %s3 = inlined_call_operand.hbm [shape: f32[1,8], index: 3, kind: output, shape index: {}]
  %s4 = sld [smem:[#allocation0]]
  $region22: #{linear_forward.1} parent=0
    _
  %s6 = ssub.s32 1, %s4
  %s7 = scalar_select 0, %s6, %s4
  %8 = sst [smem:[#allocation2]] %s1
  %9 = sst [smem:[#allocation3]] %s2
  $region1: #{linear_forward.1} parent=0
    #allocation4 [shape = 'u8[512]{0}', space=vmem, size = 0x400, scoped, tag = 'output window, operand 0, single buffered']
    #allocation5 [shape = 's32[1]{0}', space=sflag, size = 0x4, scoped, tag = 'scoped memory for linear_forward.1']
    %10 = vsyncpa [#allocation5], 0
    // Predicated region
    $region2: #{linear_forward.1} parent=1 // pred_check
      _
    $region3: #{linear_forward.1} parent=1 // pred_check_branch
      %12 = sbr.rel (0) target = $region5
    $region4: #{linear_forward.1} parent=1 // pred_region
      _
    $region5: #{linear_forward.1} parent=1 // pred_fallthru
      _
    // Predicated region
    $region6: #{linear_forward.1} parent=1 // pred_check
      _
    $region7: #{linear_forward.1} parent=1 // pred_check_branch
      %14 = sbr.rel (0) target = $region9
    $region8: #{linear_forward.1} parent=1 // pred_region
      _
    $region9: #{linear_forward.1} parent=1 // pred_fallthru
      _
    // Predicated region
    $region10: #{linear_forward.1} parent=1 // pred_check
      _
    $region11: #{linear_forward.1} parent=1 // pred_check_branch
      %16 = sbr.rel (0) target = $region13
    $region12: #{linear_forward.1} parent=1 // pred_region
      _
    $region13: #{linear_forward.1} parent=1 // pred_fallthru
      _
    %s17 = sld [smem:[#allocation2]]
    %s18 = sld [smem:[#allocation3]]
    %v19 = vld [vmem:[%s0] sm:$0x1]
    %v20 = vstv %s17
    %v21 = vmul.f32 %v19, %v20
    %v22 = vstv %s18
    %v23 = vadd.f32 %v21, %v22
    %vm24 = vcmask 57344
    %25 = vst.msk [vmem:[#allocation4] sm:$0x1] %vm24, %v23
    // Predicated region
    $region14: #{linear_forward.1} parent=1 // pred_check
      _
    $region15: #{linear_forward.1} parent=1 // pred_check_branch
      %27 = sbr.rel (0) target = $region17
    $region16: #{linear_forward.1} parent=1 // pred_region
      %s29 = ssub.s32 16, 16
      %30 = vsyncadd [#allocation5], %s29
      %s32 = sshll.u32 [#allocation4], 4
      %s33 = int_to_ptr.vmem [resolvable:$true] %s32
      %35 = dma.vmem_to_hbm [thread:$0]  %s33, 16, %s3, [#allocation5]
    $region17: #{linear_forward.1} parent=1 // pred_fallthru
      _
    // Predicated region
    $region18: #{linear_forward.1} parent=1 // pred_check
      _
    $region19: #{linear_forward.1} parent=1 // pred_check_branch
      %37 = sbr.rel (0) target = $region21
    $region20: #{linear_forward.1} parent=1 // pred_region
      %38 = dma.done [#allocation5], 16
    $region21: #{linear_forward.1} parent=1 // pred_fallthru
      _
    %39 = vsyncpa [#allocation5], 1

</llo_original>
